<compile_context>
chip_gen: v7x
topology: tpu7x:2x2x1
jax: 0.10.0
libtpu: 0.0.40
codegen_flags: <defaults>
</compile_context>

<pallas_src>
import jax
import jax.numpy as jnp
from jax.experimental import pallas as pl
from jax.experimental.pallas import tpu as pltpu


def _danet_channel_attn_kernel(x_ref, beta_ref, o_ref):
    # x_ref: (Bb, C, HW) VMEM tile, float32.
    x = x_ref[...]                                   # (Bb, C, HW) f32
    xb = x.astype(jnp.bfloat16)                      # MXU-native operands

    # attention = feat_a @ feat_a^T  -> (Bb, C, C); f32 accumulation on MXU.
    att = jnp.einsum(
        "bcn,bdn->bcd", xb, xb, preferred_element_type=jnp.float32
    )

    # softmax(rowmax(att) - att) == exp(rowmin(att) - att) / rowsum(...)
    # (shift-invariant) -> one cross-lane reduction, max exponent is 0.
    e = jnp.exp(jnp.min(att, axis=-1, keepdims=True) - att)
    denom = jnp.sum(e, axis=-1, keepdims=True)
    p = e * pl.reciprocal(denom, approx=True)        # EUP vrcp, VPU stays free

    # feat_e = attention @ feat_a  -> (Bb, C, HW); bf16 operands, f32 acc.
    feat_e = jnp.einsum(
        "bcd,bdn->bcn", p.astype(jnp.bfloat16), xb,
        preferred_element_type=jnp.float32,
    )

    beta = beta_ref[0]                               # scalar from SMEM
    o_ref[...] = (beta * feat_e + x).astype(o_ref.dtype)


def _vmem_footprint_bytes(bb, C, HW):
    """Rough per-step VMEM estimate: double-buffered in/out tiles + temps."""
    tile_f32 = bb * C * HW * 4
    tile_bf16 = bb * C * HW * 2
    att_f32 = bb * C * C * 4
    att_bf16 = bb * C * C * 2
    return 2 * 2 * tile_f32 + 2 * tile_bf16 + 3 * att_f32 + att_bf16


def danet_channel_attention(x, beta, *, vmem_budget_bytes=40 * 1024 * 1024):
    """x: (B, C, H, W) float32, beta: (1,) float32 -> (B, C, H, W)."""
    B, C, H, W = x.shape
    HW = H * W
    xf = x.reshape(B, C, HW)

    # Largest block-batch Bb dividing B that fits the VMEM budget. Small
    # problems (e.g. the test shape) collapse to a single grid step; large
    # DANet-scale problems fall back to Bb=1 with a raised scoped-VMEM limit.
    Bb = 1
    for cand in range(B, 0, -1):
        if B % cand == 0 and _vmem_footprint_bytes(cand, C, HW) <= vmem_budget_bytes:
            Bb = cand
            break

    est = _vmem_footprint_bytes(Bb, C, HW)
    compiler_kwargs = dict(dimension_semantics=("parallel",))
    if est > 16 * 1024 * 1024:  # above the smallest default scoped-VMEM limit
        compiler_kwargs["vmem_limit_bytes"] = int(
            min(max(est * 1.25, 32 * 1024 * 1024), 100 * 1024 * 1024)
        )

    out = pl.pallas_call(
        _danet_channel_attn_kernel,
        out_shape=jax.ShapeDtypeStruct((B, C, HW), x.dtype),
        grid=(B // Bb,),
        in_specs=[
            pl.BlockSpec((Bb, C, HW), lambda b: (b, 0, 0)),
            pl.BlockSpec(memory_space=pltpu.MemorySpace.SMEM),
        ],
        out_specs=pl.BlockSpec((Bb, C, HW), lambda b: (b, 0, 0)),
        compiler_params=pltpu.CompilerParams(**compiler_kwargs),
    )(xf, beta)
    return out.reshape(B, C, H, W)


def _jax_reference_bf16(x, beta):
    """Reference matching the kernel's bf16-matmul / f32-accumulate numerics."""
    B, C, H, W = x.shape
    fa = x.reshape(B, C, H * W)
    fb = fa.astype(jnp.bfloat16)
    att = jnp.einsum("bcn,bdn->bcd", fb, fb, preferred_element_type=jnp.float32)
    att_new = jnp.max(att, axis=-1, keepdims=True) - att
    p = jax.nn.softmax(att_new, axis=-1)
    fe = jnp.einsum(
        "bcd,bdn->bcn", p.astype(jnp.bfloat16), fb,
        preferred_element_type=jnp.float32,
    ).reshape(B, C, H, W)
    return beta[0] * fe + x


if __name__ == "__main__":
    key = jax.random.PRNGKey(0)
    B, C, H, W = 2, 4, 16, 16
    x = jax.random.normal(key, (B, C, H, W), dtype=jnp.float32)

    # Module __init__: beta = zeros(1)  -> exact identity (0*feat_e + x).
    beta0 = jnp.zeros((1,), dtype=jnp.float32)
    out0 = danet_channel_attention(x, beta0)
    jax.block_until_ready(out0)
    assert jnp.allclose(out0, x, atol=1e-5, rtol=1e-5)

    # Nonzero beta actually exercises the attention path; compare against a
    # reference using the same bf16-operand / f32-accumulation matmuls.
    beta_nz = jnp.full((1,), 0.5, dtype=jnp.float32)
    out_nz = danet_channel_attention(x, beta_nz)
    jax.block_until_ready(out_nz)
    ref_nz = _jax_reference_bf16(x, beta_nz)
    assert jnp.allclose(out_nz, ref_nz, atol=2e-2, rtol=2e-2), float(
        jnp.max(jnp.abs(out_nz - ref_nz))
    )

    print("KERNEL_OK")
</pallas_src>

<mosaic_0001>
module attributes {stable_mosaic.version = 11 : i64} {
  func.func @_danet_channel_attn_kernel(%arg0: i32, %arg1: memref<2x4x256xf32, #tpu.memory_space<vmem>>, %arg2: memref<1xf32, #tpu.memory_space<smem>>, %arg3: memref<2x4x256xf32, #tpu.memory_space<vmem>>) attributes {dimension_semantics = [#tpu.dimension_semantics<parallel>], iteration_bounds = array<i64: 1>, scalar_prefetch = 0 : i64, scratch_operands = 0 : i64, tpu.core_type = #tpu.core_type<tc>, window_params = [{transform_indices = @transform_0, window_bounds = array<i64: 2, 4, 256>}, {transform_indices = @transform_1, window_bounds = array<i64: 1>}, {transform_indices = @transform_2, window_bounds = array<i64: 2, 4, 256>}]} {
    %c0 = arith.constant 0 : index
    %c0_0 = arith.constant 0 : index
    %c0_1 = arith.constant 0 : index
    %0 = vector.load %arg1[%c0, %c0_0, %c0_1] : memref<2x4x256xf32, #tpu.memory_space<vmem>>, vector<2x4x256xf32>
    %1 = arith.truncf %0 : vector<2x4x256xf32> to vector<2x4x256xbf16>
    "tpu.trace_start"() <{level = 10 : i32, message = "bcn,bdn->bcd"}> : () -> ()
    %cst = arith.constant dense<0.000000e+00> : vector<2x4x4xf32>
    %2 = tpu.matmul %1, %1, %cst {dimension_numbers = #tpu.dot_dimension_numbers<[2], [2], [1], [1], [0, 0, 0, 1, 1, 1], [0], [0]>} : vector<2x4x256xbf16>, vector<2x4x256xbf16>, vector<2x4x4xf32> -> vector<2x4x4xf32>
    "tpu.trace_stop"() : () -> ()
    %cst_2 = arith.constant dense<0x7F800000> : vector<2x4xf32>
    %3 = vector.multi_reduction <minimumf>, %2, %cst_2 [2] : vector<2x4x4xf32> to vector<2x4xf32>
    %4 = vector.shape_cast %3 : vector<2x4xf32> to vector<2x4x1xf32>
    %5 = vector.broadcast %4 : vector<2x4x1xf32> to vector<2x4x4xf32>
    %6 = arith.subf %5, %2 : vector<2x4x4xf32>
    %7 = math.exp %6 : vector<2x4x4xf32>
    %cst_3 = arith.constant dense<0.000000e+00> : vector<2x4xf32>
    %8 = vector.multi_reduction <add>, %7, %cst_3 [2] : vector<2x4x4xf32> to vector<2x4xf32>
    %9 = vector.shape_cast %8 : vector<2x4xf32> to vector<2x4x1xf32>
    %10 = tpu.reciprocal %9 {approx = true} : vector<2x4x1xf32> -> vector<2x4x1xf32>
    %11 = vector.broadcast %10 : vector<2x4x1xf32> to vector<2x4x4xf32>
    %12 = arith.mulf %7, %11 : vector<2x4x4xf32>
    %13 = arith.truncf %12 : vector<2x4x4xf32> to vector<2x4x4xbf16>
    "tpu.trace_start"() <{level = 10 : i32, message = "bcd,bdn->bcn"}> : () -> ()
    %cst_4 = arith.constant dense<0.000000e+00> : vector<2x4x256xf32>
    %14 = tpu.matmul %13, %1, %cst_4 {dimension_numbers = #tpu.dot_dimension_numbers<[2], [1], [1], [2], [0, 0, 0, 1, 1, 2], [0], [0]>} : vector<2x4x4xbf16>, vector<2x4x256xbf16>, vector<2x4x256xf32> -> vector<2x4x256xf32>
    "tpu.trace_stop"() : () -> ()
    %c0_5 = arith.constant 0 : index
    %15 = memref.load %arg2[%c0_5] : memref<1xf32, #tpu.memory_space<smem>>
    %16 = vector.broadcast %15 : f32 to vector<2x4x256xf32>
    %17 = arith.mulf %16, %14 : vector<2x4x256xf32>
    %18 = arith.addf %17, %0 : vector<2x4x256xf32>
    %c0_6 = arith.constant 0 : index
    %c0_7 = arith.constant 0 : index
    %c0_8 = arith.constant 0 : index
    %19 = vector.load %arg3[%c0_6, %c0_7, %c0_8] : memref<2x4x256xf32, #tpu.memory_space<vmem>>, vector<2x4x256xf32>
    tpu.vector_store %arg3[%c0_6, %c0_7, %c0_8], %18 {strides = array<i32>} : memref<2x4x256xf32, #tpu.memory_space<vmem>>, vector<2x4x256xf32>,
    return
  }
  func.func @transform_0(%arg0: i32) -> (i32, i32, i32) {
    %c0_i32 = arith.constant 0 : i32
    %c0_i32_0 = arith.constant 0 : i32
    %c0_i32_1 = arith.constant 0 : i32
    return %arg0, %c0_i32, %c0_i32_0 : i32, i32, i32
  }
  func.func @transform_1(%arg0: i32) -> i32 {
    %c0_i32 = arith.constant 0 : i32
    %c0_i32_0 = arith.constant 0 : i32
    return %c0_i32 : i32
  }
  func.func @transform_2(%arg0: i32) -> (i32, i32, i32) {
    %c0_i32 = arith.constant 0 : i32
    %c0_i32_0 = arith.constant 0 : i32
    %c0_i32_1 = arith.constant 0 : i32
    return %arg0, %c0_i32, %c0_i32_0 : i32, i32, i32
  }
}

</mosaic_0001>

<llo_original>
// kernel: tpu_custom_call.1
$region0: #{tpu_custom_call.1}
  #allocation0 [shape = 'u32[]', space=smem, size = 0x4, offset = 0x4, fixed_abs, tag = 'smem constant byte address 0x4 - core index']
  #allocation1 [shape = 'u32[144,128]{1,0:T(1,128)}', space=vmem, size = 0x12000, scoped, tag = 'internal scratch']
  #allocation2 [shape = 'f32[1]{0:T(128)S(6)}', space=smem, size = 0x200, scoped, tag = 'scoped memory for tpu_custom_call.1']
  %s0 = inlined_call_operand.hbm [shape: f32[2,4,256], index: 0, kind: input, shape index: {}]
  %s1 = inlined_call_operand.<no memory space> [shape: f32[1], index: 1, kind: input, shape index: {}]
  %s2 = inlined_call_operand.hbm [shape: f32[2,4,256], index: 2, kind: output, shape index: {}]
  %s3 = sld [smem:[#allocation0]]
  $region22: #{tpu_custom_call.1} parent=0
    _
  %s5 = ssub.s32 1, %s3
  %s6 = scalar_select 0, %s5, %s3
  %7 = sst [smem:[#allocation2]] %s1
  $region1: #{tpu_custom_call.1} parent=0
    #allocation3 [shape = 'u8[8192]{0}', space=vmem, size = 0x2000, scoped, tag = 'input window, operand 0, single buffered']
    #allocation4 [shape = 's32[1]{0}', space=sflag, size = 0x4, scoped, tag = 'scoped memory for tpu_custom_call.1']
    #allocation5 [shape = 's32[1]{0}', space=sflag, size = 0x4, scoped, tag = 'scoped memory for tpu_custom_call.1']
    #allocation6 [shape = 'u8[8192]{0}', space=vmem, size = 0x2000, scoped, tag = 'output window, operand 0, single buffered']
    %8 = vsyncpa [#allocation4], 0
    %9 = vsyncpa [#allocation5], 0
    // Predicated region
    $region2: #{tpu_custom_call.1} parent=1 // pred_check
      _
    $region3: #{tpu_custom_call.1} parent=1 // pred_check_branch
      %11 = sbr.rel (0) target = $region5
    $region4: #{tpu_custom_call.1} parent=1 // pred_region
      %s13 = ssub.s32 256, 256
      %14 = vsyncadd [#allocation4], %s13
      %s15 = sshll.u32 [#allocation3], 4
      %s16 = int_to_ptr.vmem [resolvable:$true] %s15
      %21 = dma.hbm_to_vmem [thread:$0]  %s0, 256, %s16, [#allocation4], 128, 128, 8
    $region5: #{tpu_custom_call.1} parent=1 // pred_fallthru
      _
    // Predicated region
    $region6: #{tpu_custom_call.1} parent=1 // pred_check
      _
    $region7: #{tpu_custom_call.1} parent=1 // pred_check_branch
      %23 = sbr.rel (0) target = $region9
    $region8: #{tpu_custom_call.1} parent=1 // pred_region
      _
    $region9: #{tpu_custom_call.1} parent=1 // pred_fallthru
      _
    // Predicated region
    $region10: #{tpu_custom_call.1} parent=1 // pred_check
      _
    $region11: #{tpu_custom_call.1} parent=1 // pred_check_branch
      %25 = sbr.rel (0) target = $region13
    $region12: #{tpu_custom_call.1} parent=1 // pred_region
      %26 = dma.done [#allocation4], 256
    $region13: #{tpu_custom_call.1} parent=1 // pred_fallthru
      _
    %v28 = vld [vmem:[#allocation3] sm:$0xff]
    %v29 = vld [vmem:[#allocation3 + $0x8] sm:$0xff]
    %v32 = vcombine.high %v28, %v28
    %v33 = vcombine.high %v29, %v29
    %v36 = vpack.c.bf16 %v28, %v28
    %v37 = vpack.c.bf16 %v32, %v32
    %v38 = vpack.c.bf16 %v29, %v29
    %v39 = vpack.c.bf16 %v33, %v33
    %40 = vmatprep.subr.bf16.mxu0 %v37
    %41 = vmatpush1.bf16.xpose.msra.mxu0 %v36
    %42 = vmatprep.subr.bf16.mxu0 0
    %43 = vmatpush1.bf16.xpose.msra.mxu0 0
    %44 = vmatprep.subr.bf16.mxu0 0
    %45 = vmatpush1.bf16.xpose.msra.mxu0 0
    %46 = vmatprep.subr.bf16.mxu0 0
    %47 = vmatpush1.bf16.xpose.msra.mxu0 0
    %48 = vmatprep.subr.bf16.mxu0 0
    %49 = vmatpush1.bf16.xpose.msra.mxu0 0
    %50 = vmatprep.subr.bf16.mxu0 0
    %51 = vmatpush1.bf16.xpose.msra.mxu0 0
    %52 = vmatprep.subr.bf16.mxu0 0
    %53 = vmatpush1.bf16.xpose.msra.mxu0 0
    %54 = vmatprep.subr.bf16.mxu0 0
    %55 = vmatpush1.bf16.xpose.msra.mxu0 0
    %56 = vmatprep.subr.bf16.mxu0 0
    %57 = vmatpush1.bf16.xpose.msra.mxu0 0
    %58 = vmatprep.subr.bf16.mxu0 0
    %59 = vmatpush1.bf16.xpose.msra.mxu0 0
    %60 = vmatprep.subr.bf16.mxu0 0
    %61 = vmatpush1.bf16.xpose.msra.mxu0 0
    %62 = vmatprep.subr.bf16.mxu0 0
    %63 = vmatpush1.bf16.xpose.msra.mxu0 0
    %64 = vmatprep.subr.bf16.mxu0 0
    %65 = vmatpush1.bf16.xpose.msra.mxu0 0
    %66 = vmatprep.subr.bf16.mxu0 0
    %67 = vmatpush1.bf16.xpose.msra.mxu0 0
    %68 = vmatprep.subr.bf16.mxu0 0
    %69 = vmatpush1.bf16.xpose.msra.mxu0 0
    %70 = vmatprep.subr.bf16.mxu0 0
    %71 = vmatpush1.bf16.xpose.msra.mxu0 0
    %72 = vmatprep.mubr.bf16.mxu0 %v37
    %73 = vmatmul.mubr.bf16.gmra.mrb[0].mxu0 %v36
    %v74 = vpop.f32.mrb[0].mxu0
    %v75 = vadd.f32 0.0, %v74
    %v76 = vpop.f32.mrb[0].mxu0
    %v77 = vpop.f32.mrb[0].mxu0
    %v78 = vpop.f32.mrb[0].mxu0
    %79 = vdwg.mxu0
    %80 = vmatprep.subr.bf16.mxu0 %v39
    %81 = vmatpush1.bf16.xpose.msra.mxu0 %v38
    %82 = vmatprep.subr.bf16.mxu0 0
    %83 = vmatpush1.bf16.xpose.msra.mxu0 0
    %84 = vmatprep.subr.bf16.mxu0 0
    %85 = vmatpush1.bf16.xpose.msra.mxu0 0
    %86 = vmatprep.subr.bf16.mxu0 0
    %87 = vmatpush1.bf16.xpose.msra.mxu0 0
    %88 = vmatprep.subr.bf16.mxu0 0
    %89 = vmatpush1.bf16.xpose.msra.mxu0 0
    %90 = vmatprep.subr.bf16.mxu0 0
    %91 = vmatpush1.bf16.xpose.msra.mxu0 0
    %92 = vmatprep.subr.bf16.mxu0 0
    %93 = vmatpush1.bf16.xpose.msra.mxu0 0
    %94 = vmatprep.subr.bf16.mxu0 0
    %95 = vmatpush1.bf16.xpose.msra.mxu0 0
    %96 = vmatprep.subr.bf16.mxu0 0
    %97 = vmatpush1.bf16.xpose.msra.mxu0 0
    %98 = vmatprep.subr.bf16.mxu0 0
    %99 = vmatpush1.bf16.xpose.msra.mxu0 0
    %100 = vmatprep.subr.bf16.mxu0 0
    %101 = vmatpush1.bf16.xpose.msra.mxu0 0
    %102 = vmatprep.subr.bf16.mxu0 0
    %103 = vmatpush1.bf16.xpose.msra.mxu0 0
    %104 = vmatprep.subr.bf16.mxu0 0
    %105 = vmatpush1.bf16.xpose.msra.mxu0 0
    %106 = vmatprep.subr.bf16.mxu0 0
    %107 = vmatpush1.bf16.xpose.msra.mxu0 0
    %108 = vmatprep.subr.bf16.mxu0 0
    %109 = vmatpush1.bf16.xpose.msra.mxu0 0
    %110 = vmatprep.subr.bf16.mxu0 0
    %111 = vmatpush1.bf16.xpose.msra.mxu0 0
    %112 = vmatprep.mubr.bf16.mxu0 %v39
    %113 = vmatmul.mubr.bf16.gmra.mrb[0].mxu0 %v38
    %v114 = vpop.f32.mrb[0].mxu0
    %v115 = vadd.f32 0.0, %v114
    %v116 = vpop.f32.mrb[0].mxu0
    %v117 = vpop.f32.mrb[0].mxu0
    %v118 = vpop.f32.mrb[0].mxu0
    %119 = vdwg.mxu0
    %vm120 = vcmask 27648
    %v121 = vsel %vm120, %v75, inf
    %122 = vmin.xlane.f32.xlu0 %v121
    %v123 = vpop.xlane.xlu0 %122
    %v124 = vsel %vm120, %v115, inf
    %125 = vmin.xlane.f32.xlu0 %v124
    %v126 = vpop.xlane.xlu0 %125
    %v127 = vsub.f32 %v123, %v75
    %v128 = vsub.f32 %v126, %v115
    %v129 = vmul.f32 %v127, 1.442695
    %v130 = vpow.pop %v129
    %v131 = vmul.f32 %v128, 1.442695
    %v132 = vpow.pop %v131
    %v133 = vsel %vm120, %v130, 0.0
    %134 = vadd.xlane.f32.xlu0 %v133
    %v135 = vpop.xlane.xlu0 %134
    %v136 = vsel %vm120, %v132, 0.0
    %137 = vadd.xlane.f32.xlu0 %v136
    %v138 = vpop.xlane.xlu0 %137
    %v139 = vrcp.pop %v135
    %v140 = vrcp.pop %v138
    %v141 = vmul.f32 %v130, %v139
    %v142 = vmul.f32 %v132, %v140
    %v143 = vpack.c.bf16 %v141, %v141
    %v144 = vpack.c.bf16 %v142, %v142
    %vm145 = vcmask 31744
    %v147 = vsel %vm145, %v143, 0
    %vm149 = vcmask 1041408
    %v151 = vsel %vm149, %v36, 0
    %v154 = vsel %vm149, %v37, 0
    %156 = vmatprep.subr.bf16.mxu0 %v154
    %157 = vmatpush1.bf16.msra.mxu0 %v151
    %158 = vmatprep.subr.bf16.mxu0 0
    %159 = vmatpush1.bf16.msra.mxu0 0
    %160 = vmatprep.subr.bf16.mxu0 0
    %161 = vmatpush1.bf16.msra.mxu0 0
    %162 = vmatprep.subr.bf16.mxu0 0
    %163 = vmatpush1.bf16.msra.mxu0 0
    %164 = vmatprep.subr.bf16.mxu0 0
    %165 = vmatpush1.bf16.msra.mxu0 0
    %166 = vmatprep.subr.bf16.mxu0 0
    %167 = vmatpush1.bf16.msra.mxu0 0
    %168 = vmatprep.subr.bf16.mxu0 0
    %169 = vmatpush1.bf16.msra.mxu0 0
    %170 = vmatprep.subr.bf16.mxu0 0
    %171 = vmatpush1.bf16.msra.mxu0 0
    %172 = vmatprep.subr.bf16.mxu0 0
    %173 = vmatpush1.bf16.msra.mxu0 0
    %174 = vmatprep.subr.bf16.mxu0 0
    %175 = vmatpush1.bf16.msra.mxu0 0
    %176 = vmatprep.subr.bf16.mxu0 0
    %177 = vmatpush1.bf16.msra.mxu0 0
    %178 = vmatprep.subr.bf16.mxu0 0
    %179 = vmatpush1.bf16.msra.mxu0 0
    %180 = vmatprep.subr.bf16.mxu0 0
    %181 = vmatpush1.bf16.msra.mxu0 0
    %182 = vmatprep.subr.bf16.mxu0 0
    %183 = vmatpush1.bf16.msra.mxu0 0
    %184 = vmatprep.subr.bf16.mxu0 0
    %185 = vmatpush1.bf16.msra.mxu0 0
    %186 = vmatprep.subr.bf16.mxu0 0
    %187 = vmatpush1.bf16.msra.mxu0 0
    %188 = vmatprep.mubr.bf16.mxu0 0
    %189 = vmatmul.mubr.bf16.gmra.mrb[0].mxu0 %v147
    %v190 = vpop.f32.mrb[0].mxu0
    %v191 = vadd.f32 0.0, %v190
    %v192 = vpop.f32.mrb[0].mxu0
    %v193 = vadd.f32 0.0, %v192
    %v194 = vpop.f32.mrb[0].mxu0
    %v195 = vpop.f32.mrb[0].mxu0
    %196 = vdwg.mxu0
    %v198 = vsel %vm145, %v144, 0
    %v201 = vsel %vm149, %v38, 0
    %v204 = vsel %vm149, %v39, 0
    %206 = vmatprep.subr.bf16.mxu0 %v204
    %207 = vmatpush1.bf16.msra.mxu0 %v201
    %208 = vmatprep.subr.bf16.mxu0 0
    %209 = vmatpush1.bf16.msra.mxu0 0
    %210 = vmatprep.subr.bf16.mxu0 0
    %211 = vmatpush1.bf16.msra.mxu0 0
    %212 = vmatprep.subr.bf16.mxu0 0
    %213 = vmatpush1.bf16.msra.mxu0 0
    %214 = vmatprep.subr.bf16.mxu0 0
    %215 = vmatpush1.bf16.msra.mxu0 0
    %216 = vmatprep.subr.bf16.mxu0 0
    %217 = vmatpush1.bf16.msra.mxu0 0
    %218 = vmatprep.subr.bf16.mxu0 0
    %219 = vmatpush1.bf16.msra.mxu0 0
    %220 = vmatprep.subr.bf16.mxu0 0
    %221 = vmatpush1.bf16.msra.mxu0 0
    %222 = vmatprep.subr.bf16.mxu0 0
    %223 = vmatpush1.bf16.msra.mxu0 0
    %224 = vmatprep.subr.bf16.mxu0 0
    %225 = vmatpush1.bf16.msra.mxu0 0
    %226 = vmatprep.subr.bf16.mxu0 0
    %227 = vmatpush1.bf16.msra.mxu0 0
    %228 = vmatprep.subr.bf16.mxu0 0
    %229 = vmatpush1.bf16.msra.mxu0 0
    %230 = vmatprep.subr.bf16.mxu0 0
    %231 = vmatpush1.bf16.msra.mxu0 0
    %232 = vmatprep.subr.bf16.mxu0 0
    %233 = vmatpush1.bf16.msra.mxu0 0
    %234 = vmatprep.subr.bf16.mxu0 0
    %235 = vmatpush1.bf16.msra.mxu0 0
    %236 = vmatprep.subr.bf16.mxu0 0
    %237 = vmatpush1.bf16.msra.mxu0 0
    %238 = vmatprep.mubr.bf16.mxu0 0
    %239 = vmatmul.mubr.bf16.gmra.mrb[0].mxu0 %v198
    %v240 = vpop.f32.mrb[0].mxu0
    %v241 = vadd.f32 0.0, %v240
    %v242 = vpop.f32.mrb[0].mxu0
    %v243 = vadd.f32 0.0, %v242
    %v244 = vpop.f32.mrb[0].mxu0
    %v245 = vpop.f32.mrb[0].mxu0
    %246 = vdwg.mxu0
    %s247 = sld [smem:[#allocation2]]
    %v248 = vstv %s247
    %v249 = vmul.f32 %v248, %v191
    %v250 = vmul.f32 %v248, %v193
    %v251 = vmul.f32 %v248, %v241
    %v252 = vmul.f32 %v248, %v243
    %v253 = vadd.f32 %v249, %v28
    %v254 = vadd.f32 %v250, %v32
    %v255 = vadd.f32 %v251, %v29
    %v256 = vadd.f32 %v252, %v33
    %v261 = vcombine.low %v253, %v254
    %v262 = vcombine.low %v255, %v256
    %265 = vst [vmem:[#allocation6] sm:$0xff] %v261
    %266 = vst [vmem:[#allocation6 + $0x8] sm:$0xff] %v262
    // Predicated region
    $region14: #{tpu_custom_call.1} parent=1 // pred_check
      _
    $region15: #{tpu_custom_call.1} parent=1 // pred_check_branch
      %268 = sbr.rel (0) target = $region17
    $region16: #{tpu_custom_call.1} parent=1 // pred_region
      %s270 = ssub.s32 256, 256
      %271 = vsyncadd [#allocation5], %s270
      %s272 = sshll.u32 [#allocation6], 4
      %s273 = int_to_ptr.vmem [resolvable:$true] %s272
      %278 = dma.vmem_to_hbm [thread:$0]  %s273, 256, %s2, [#allocation5], 128, 128, 8
    $region17: #{tpu_custom_call.1} parent=1 // pred_fallthru
      _
    // Predicated region
    $region18: #{tpu_custom_call.1} parent=1 // pred_check
      _
    $region19: #{tpu_custom_call.1} parent=1 // pred_check_branch
      %280 = sbr.rel (0) target = $region21
    $region20: #{tpu_custom_call.1} parent=1 // pred_region
      %281 = dma.done [#allocation5], 256
    $region21: #{tpu_custom_call.1} parent=1 // pred_fallthru
      _
    %282 = vsyncpa [#allocation4], 1
    %283 = vsyncpa [#allocation5], 1

</llo_original>
